<compile_context>
chip_gen: v5e
topology: v5e:2x2
jax: 0.10.0
libtpu: 0.0.40
codegen_flags: <defaults>
</compile_context>

<pallas_src>
import functools
import math

import jax
import jax.numpy as jnp
from jax.experimental import pallas as pl
from jax.experimental.pallas import tpu as pltpu


# ---------------------------------------------------------------------------
# Pallas kernel: one fused GEMM row-panel + additive term
# ---------------------------------------------------------------------------
def _fused_patch_embed_kernel(x_ref, w_ref, add_ref, o_ref):
    # x_ref:   (tm, K)  row panel of flattened patches (compute dtype, double-buffered)
    # w_ref:   (K, E)   fused projection weight (resident, single-buffered)
    # add_ref: (tm, E)  fused additive term (biases + positional emb), periodic in N (resident)
    # o_ref:   (tm, E)
    acc = jnp.dot(x_ref[...], w_ref[...], preferred_element_type=jnp.float32)
    o_ref[...] = (acc + add_ref[...].astype(jnp.float32)).astype(o_ref.dtype)


# ---------------------------------------------------------------------------
# Helpers
# ---------------------------------------------------------------------------
def _patchify(x, patch_size):
    """(B, C, H, W) -> (B, N, C*P*P); patch vector in (C, kh, kw) order (matches Conv2d)."""
    B, C, H, W = x.shape
    P = patch_size
    Gh, Gw = H // P, W // P
    x = x.reshape(B, C, Gh, P, Gw, P)
    x = x.transpose(0, 2, 4, 1, 3, 5)          # (B, Gh, Gw, C, P, P)
    return x.reshape(B, Gh * Gw, C * P * P)


def _row_tile(M, N, *, bytes_in_row, bytes_add_row, bytes_out_row, weight_bytes,
              target_rows=512, vmem_budget_bytes=40 * 1024 * 1024, min_grid=4):
    """Row tile for the flattened (B*N, K) patch matrix.

    tm is a multiple of lcm(N, 8): multiple of N so the (N, E) additive tensor tiles
    periodically with a constant index_map, multiple of 8 for the sublane rule (unless
    the tile covers all M rows).  Sized near `target_rows` (v6e measurements favour 512+
    for mem-bound tiles), shrunk so the pipelined working set fits a VMEM budget chosen
    for v7x's 64 MiB physical VMEM, and capped so the 1-D grid keeps >= `min_grid` steps
    when the problem is large enough (v7x has 2 TensorCores on the "parallel" axis).
    """
    lcm_n8 = N * 8 // math.gcd(N, 8)
    if M <= lcm_n8:
        return M                     # one small tile covers everything (toy shapes)

    def footprint(t):
        # 2x pipelined patch panel + 1x resident weight + 1x resident add + 2x output panel
        return (2 * t * bytes_in_row + weight_bytes
                + t * bytes_add_row + 2 * t * bytes_out_row)

    tm = min(M, max(lcm_n8, (target_rows // lcm_n8) * lcm_n8))
    tm -= tm % lcm_n8
    # Keep both v7x TensorCores fed and >= 2 pipeline steps each (when possible).
    while tm > lcm_n8 and M // lcm_n8 >= min_grid and pl.cdiv(M, tm) < min_grid:
        tm -= lcm_n8
    # Shrink until the working set fits the VMEM budget.
    while tm > lcm_n8 and footprint(tm) > vmem_budget_bytes:
        tm -= lcm_n8
    return tm


# ---------------------------------------------------------------------------
# Wrapper
# ---------------------------------------------------------------------------
@functools.partial(jax.jit, static_argnames=("patch_size", "dual_embedding", "compute_dtype"))
def patch_embed_forward(x, params, *, patch_size, dual_embedding,
                        compute_dtype=jnp.bfloat16):
    B, C, H, W = x.shape
    P = patch_size
    Gh, Gw = H // P, W // P
    N = Gh * Gw
    E = params["proj_w"].shape[0]
    K = C * P * P
    M = B * N

    out_dtype = x.dtype
    cdt = jnp.dtype(compute_dtype)

    # Cast the activation to the compute dtype BEFORE patchify: halves the HBM traffic of
    # the relayout and of the dominant (M, K) kernel input stream.
    patches = _patchify(x.astype(cdt), P).reshape(M, K)

    # Conv weight as a (K, E) matmul weight; Conv bias.  Parameter fusion done in f32,
    # only the final GEMM operands are cast to the compute dtype.
    wp = params["proj_w"].reshape(E, K).T.astype(jnp.float32)      # (K, E)
    bp = params["proj_b"].astype(jnp.float32)                      # (E,)

    if dual_embedding:
        # Valid ONLY because norm_layer=None -> Identity (everything is affine).
        w_gl = (params["global_w"] + params["local_w"]).T.astype(jnp.float32)   # (E, E)
        w_fused = jnp.dot(wp, w_gl, precision=jax.lax.Precision.HIGHEST)        # (K, E)
        add = (jnp.dot(bp, w_gl, precision=jax.lax.Precision.HIGHEST)
               + params["global_b"] + params["local_b"])[None, :] \
              + (params["global_pos_emb"] + params["local_pos_emb"]).reshape(N, E)
    else:
        # norm_layer=None -> Identity; plain projection.
        w_fused = wp
        add = jnp.broadcast_to(bp[None, :], (N, E))

    cbytes = cdt.itemsize
    obytes = jnp.dtype(out_dtype).itemsize

    tm = _row_tile(
        M, N,
        bytes_in_row=K * cbytes,
        bytes_add_row=E * cbytes,
        bytes_out_row=E * obytes,
        weight_bytes=K * E * cbytes,
    )

    # Additive term tiled to one row panel (periodic in N), stored at the compute dtype:
    # small, single-buffered, resident in VMEM across the whole grid.
    add_tiled = jnp.tile(add, (tm // N, 1)).astype(cdt)
    w_fused = w_fused.astype(cdt)

    grid = (pl.cdiv(M, tm),)

    cost = pl.CostEstimate(
        flops=2 * M * K * E,
        bytes_accessed=(M * K * cbytes + K * E * cbytes
                        + tm * E * cbytes + M * E * obytes),
        transcendentals=0,
    )

    out = pl.pallas_call(
        _fused_patch_embed_kernel,
        out_shape=jax.ShapeDtypeStruct((M, E), out_dtype),
        grid_spec=pltpu.PrefetchScalarGridSpec(
            num_scalar_prefetch=0,
            grid=grid,
            in_specs=[
                # Patch row panel: pipelined (double-buffered) HBM stream.
                pl.BlockSpec((tm, K), lambda i: (i, 0)),
                # Fused weight: constant index_map -> resident; single buffer saves VMEM.
                pl.BlockSpec((K, E), lambda i: (0, 0), pipeline_mode=pl.Buffered(1)),
                # Fused additive term: resident, periodic in N, single buffer.
                pl.BlockSpec((tm, E), lambda i: (0, 0), pipeline_mode=pl.Buffered(1)),
            ],
            # TODO(synk): for E < 128, fold 128/E row-groups into lanes for unmasked stores.
            out_specs=pl.BlockSpec((tm, E), lambda i: (i, 0)),
        ),
        compiler_params=pltpu.CompilerParams(
            dimension_semantics=("parallel",),
            # Allow XLA to fuse the patchify transpose/cast into the kernel's input DMA
            # (avoids a separate HBM materialization of the (M, K) patch matrix).
            allow_input_fusion=[True, False, False],
            # Above v5e's 16 MiB / v6e-v7x's 32 MiB scoped defaults, below v7x's 64 MiB
            # physical VMEM; _row_tile keeps the working set under ~40 MiB.
            vmem_limit_bytes=48 * 1024 * 1024,
        ),
        cost_estimate=cost,
    )(patches, w_fused, add_tiled)

    return out.reshape(B, N, E)


# ---------------------------------------------------------------------------
# Pure-JAX faithful (unfused) reference — matches the PyTorch module op-for-op
# ---------------------------------------------------------------------------
def patch_embed_reference(x, params, *, patch_size, dual_embedding):
    B, C, H, W = x.shape
    P = patch_size
    E = params["proj_w"].shape[0]
    K = C * P * P
    patches = _patchify(x, P)                                       # (B, N, K)
    h = patches @ params["proj_w"].reshape(E, K).T + params["proj_b"][None, None, :]
    if dual_embedding:
        g = h @ params["global_w"].T + params["global_b"] + params["global_pos_emb"]
        l = h @ params["local_w"].T + params["local_b"] + params["local_pos_emb"]
        h = g + l
    return h


# ---------------------------------------------------------------------------
# Main
# ---------------------------------------------------------------------------
if __name__ == "__main__":
    # Small shapes consistent with the module: img_size=16, patch_size=4,
    # in_chans=4, embed_dim=32, dual_embedding on.
    B, C, H, W = 2, 4, 16, 16
    P = 4
    E = 32
    N = (H // P) * (W // P)        # 16 patches
    K = C * P * P                  # 64

    key = jax.random.PRNGKey(0)
    ks = jax.random.split(key, 8)

    x = jax.random.normal(ks[0], (B, C, H, W), dtype=jnp.float32)

    # Deterministic synthetic parameters (shapes match the PyTorch module's __init__).
    params = {
        "proj_w": jax.random.normal(ks[1], (E, C, P, P), dtype=jnp.float32) * 0.05,  # Conv2d weight
        "proj_b": jax.random.normal(ks[2], (E,), dtype=jnp.float32) * 0.05,          # Conv2d bias
        "global_w": jax.random.normal(ks[3], (E, E), dtype=jnp.float32) * 0.05,      # Linear weight
        "global_b": jax.random.normal(ks[4], (E,), dtype=jnp.float32) * 0.05,
        "local_w": jax.random.normal(ks[5], (E, E), dtype=jnp.float32) * 0.05,
        "local_b": jax.random.normal(ks[6], (E,), dtype=jnp.float32) * 0.05,
        "global_pos_emb": jax.random.normal(ks[7], (1, N, E), dtype=jnp.float32) * 0.02,
        "local_pos_emb": jax.random.normal(jax.random.fold_in(key, 99), (1, N, E),
                                           dtype=jnp.float32) * 0.02,
    }

    def check(dual, compute_dtype, tol):
        out = patch_embed_forward(x, params, patch_size=P, dual_embedding=dual,
                                  compute_dtype=compute_dtype)
        out = jax.block_until_ready(out)
        ref = patch_embed_reference(x, params, patch_size=P, dual_embedding=dual)
        assert out.shape == (B, N, E), out.shape
        max_diff = float(jnp.max(jnp.abs(out - ref)))
        assert jnp.allclose(out, ref, atol=tol, rtol=tol), (
            "mismatch dual=%s dtype=%s, max abs diff = %g" % (dual, compute_dtype, max_diff))

    # f32 compute path: tight check of the fused-GEMM structure (fp association differs
    # slightly from the unfused reference, hence 5e-3).
    check(True, jnp.float32, 5e-3)
    check(False, jnp.float32, 5e-3)
    # bf16 compute path (the default on v5e/v6e/v7x): bf16-quantized activations/weights
    # with f32 accumulation; looser tolerance vs. the f32 reference.
    check(True, jnp.bfloat16, 2.5e-2)
    check(False, jnp.bfloat16, 2.5e-2)

    print("KERNEL_OK")
</pallas_src>

<mosaic_0001>
module attributes {stable_mosaic.version = 11 : i64} {
  func.func @_fused_patch_embed_kernel(%arg0: i32, %arg1: memref<32x64xf32, #tpu.memory_space<vmem>>, %arg2: memref<64x32xf32, #tpu.memory_space<vmem>>, %arg3: memref<32x32xf32, #tpu.memory_space<vmem>>, %arg4: memref<32x32xf32, #tpu.memory_space<vmem>>) attributes {dimension_semantics = [#tpu.dimension_semantics<parallel>], iteration_bounds = array<i64: 1>, scalar_prefetch = 0 : i64, scratch_operands = 0 : i64, tpu.core_type = #tpu.core_type<tc>, window_params = [{transform_indices = @transform_0, window_bounds = array<i64: 32, 64>}, {pipeline_mode = #tpu.pipeline_mode<synchronous>, transform_indices = @transform_1, window_bounds = array<i64: 64, 32>}, {pipeline_mode = #tpu.pipeline_mode<synchronous>, transform_indices = @transform_2, window_bounds = array<i64: 32, 32>}, {transform_indices = @transform_3, window_bounds = array<i64: 32, 32>}]} {
    %c0 = arith.constant 0 : index
    %c0_0 = arith.constant 0 : index
    %0 = vector.load %arg1[%c0, %c0_0] : memref<32x64xf32, #tpu.memory_space<vmem>>, vector<32x64xf32>
    %c0_1 = arith.constant 0 : index
    %c0_2 = arith.constant 0 : index
    %1 = vector.load %arg2[%c0_1, %c0_2] : memref<64x32xf32, #tpu.memory_space<vmem>>, vector<64x32xf32>
    %cst = arith.constant dense<0.000000e+00> : vector<32x32xf32>
    %2 = tpu.matmul %0, %1, %cst {dimension_numbers = #tpu.dot_dimension_numbers<[1], [0], [0], [1], [0, 0, 1, 1], [], []>} : vector<32x64xf32>, vector<64x32xf32>, vector<32x32xf32> -> vector<32x32xf32>
    %c0_3 = arith.constant 0 : index
    %c0_4 = arith.constant 0 : index
    %3 = vector.load %arg3[%c0_3, %c0_4] : memref<32x32xf32, #tpu.memory_space<vmem>>, vector<32x32xf32>
    %4 = arith.addf %2, %3 : vector<32x32xf32>
    %c0_5 = arith.constant 0 : index
    %c0_6 = arith.constant 0 : index
    %5 = vector.load %arg4[%c0_5, %c0_6] : memref<32x32xf32, #tpu.memory_space<vmem>>, vector<32x32xf32>
    tpu.vector_store %arg4[%c0_5, %c0_6], %4 {strides = array<i32>} : memref<32x32xf32, #tpu.memory_space<vmem>>, vector<32x32xf32>,
    return
  }
  func.func @transform_0(%arg0: i32) -> (i32, i32) {
    %c0_i32 = arith.constant 0 : i32
    %c0_i32_0 = arith.constant 0 : i32
    return %arg0, %c0_i32 : i32, i32
  }
  func.func @transform_1(%arg0: i32) -> (i32, i32) {
    %c0_i32 = arith.constant 0 : i32
    %c0_i32_0 = arith.constant 0 : i32
    %c0_i32_1 = arith.constant 0 : i32
    return %c0_i32, %c0_i32_0 : i32, i32
  }
  func.func @transform_2(%arg0: i32) -> (i32, i32) {
    %c0_i32 = arith.constant 0 : i32
    %c0_i32_0 = arith.constant 0 : i32
    %c0_i32_1 = arith.constant 0 : i32
    return %c0_i32, %c0_i32_0 : i32, i32
  }
  func.func @transform_3(%arg0: i32) -> (i32, i32) {
    %c0_i32 = arith.constant 0 : i32
    %c0_i32_0 = arith.constant 0 : i32
    return %arg0, %c0_i32 : i32, i32
  }
}

</mosaic_0001>

<llo_original>
// kernel: patch_embed_forward.1
$region0: #{patch_embed_forward.1}
  #allocation0 [shape = 'u32[]', space=smem, size = 0x4, offset = 0x4, fixed_abs, tag = 'smem constant byte address 0x4 - core index']
  #allocation1 [shape = 'u32[72,128]{1,0:T(1,128)}', space=vmem, size = 0x9000, scoped, tag = 'internal scratch']
  %s0 = inlined_call_operand.vmem [shape: f32[32,64], index: 0, kind: input, shape index: {}]
  %s1 = inlined_call_operand.vmem [shape: f32[64,32], index: 1, kind: input, shape index: {}]
  %s2 = inlined_call_operand.vmem [shape: f32[32,32], index: 2, kind: input, shape index: {}]
  %s3 = inlined_call_operand.hbm [shape: f32[32,32], index: 3, kind: output, shape index: {}]
  %s4 = sld [smem:[#allocation0]]
  $region22: #{patch_embed_forward.1} parent=0
    _
  %s6 = ssub.s32 1, %s4
  %s7 = scalar_select 0, %s6, %s4
  $region1: #{patch_embed_forward.1} parent=0
    #allocation2 [shape = 'u8[16384]{0}', space=vmem, size = 0x4000, scoped, tag = 'output window, operand 0, single buffered']
    #allocation3 [shape = 's32[1]{0}', space=sflag, size = 0x4, scoped, tag = 'scoped memory for patch_embed_forward.1']
    %8 = vsyncpa [#allocation3], 0
    // Predicated region
    $region2: #{patch_embed_forward.1} parent=1 // pred_check
      _
    $region3: #{patch_embed_forward.1} parent=1 // pred_check_branch
      %10 = sbr.rel (0) target = $region5
    $region4: #{patch_embed_forward.1} parent=1 // pred_region
      _
    $region5: #{patch_embed_forward.1} parent=1 // pred_fallthru
      _
    // Predicated region
    $region6: #{patch_embed_forward.1} parent=1 // pred_check
      _
    $region7: #{patch_embed_forward.1} parent=1 // pred_check_branch
      %12 = sbr.rel (0) target = $region9
    $region8: #{patch_embed_forward.1} parent=1 // pred_region
      _
    $region9: #{patch_embed_forward.1} parent=1 // pred_fallthru
      _
    // Predicated region
    $region10: #{patch_embed_forward.1} parent=1 // pred_check
      _
    $region11: #{patch_embed_forward.1} parent=1 // pred_check_branch
      %14 = sbr.rel (0) target = $region13
    $region12: #{patch_embed_forward.1} parent=1 // pred_region
      _
    $region13: #{patch_embed_forward.1} parent=1 // pred_fallthru
      _
    %v15 = vld [vmem:[%s0] sm:$0xff]
    %v16 = vld [vmem:[%s0 + $0x8] sm:$0xff]
    %v17 = vld [vmem:[%s0 + $0x10] sm:$0xff]
    %v18 = vld [vmem:[%s0 + $0x18] sm:$0xff]
    %v19 = vld [vmem:[%s1] sm:$0xff]
    %v20 = vld [vmem:[%s1 + $0x8] sm:$0xff]
    %v21 = vld [vmem:[%s1 + $0x10] sm:$0xff]
    %v22 = vld [vmem:[%s1 + $0x18] sm:$0xff]
    %v23 = vld [vmem:[%s1 + $0x20] sm:$0xff]
    %v24 = vld [vmem:[%s1 + $0x28] sm:$0xff]
    %v25 = vld [vmem:[%s1 + $0x30] sm:$0xff]
    %v26 = vld [vmem:[%s1 + $0x38] sm:$0xff]
    %v27 = vld [vmem:[%s2] sm:$0xff]
    %v28 = vld [vmem:[%s2 + $0x8] sm:$0xff]
    %v29 = vld [vmem:[%s2 + $0x10] sm:$0xff]
    %v30 = vld [vmem:[%s2 + $0x18] sm:$0xff]
    %vm31 = vcmask 523264
    %v33 = vsel %vm31, %v15, 0
    %v36 = vsel %vm31, %v16, 0
    %v39 = vsel %vm31, %v17, 0
    %v42 = vsel %vm31, %v18, 0
    %44 = vmatpush.msra.mxu0 0.0
    %45 = vmatpush.msra.mxu0 0.0
    %46 = vmatpush.msra.mxu0 0.0
    %47 = vmatpush.msra.mxu0 0.0
    %48 = vmatpush.msra.mxu0 0.0
    %49 = vmatpush.msra.mxu0 0.0
    %50 = vmatpush.msra.mxu0 0.0
    %51 = vmatpush.msra.mxu0 0.0
    %52 = vmatpush.msra.mxu0 %v26
    %53 = vmatpush.msra.mxu0 %v25
    %54 = vmatpush.msra.mxu0 %v24
    %55 = vmatpush.msra.mxu0 %v23
    %56 = vmatpush.msra.mxu0 %v22
    %57 = vmatpush.msra.mxu0 %v21
    %58 = vmatpush.msra.mxu0 %v20
    %59 = vmatpush.msra.mxu0 %v19
    %60 = vmatmul.f32.gmra.mxu0 %v33
    %v61 = vpop.f32.mrf.mxu0
    %v62 = vadd.f32 %v27, %v61
    %63 = vmatmul.f32.gmra.mxu0 %v36
    %v64 = vpop.f32.mrf.mxu0
    %v65 = vadd.f32 %v28, %v64
    %66 = vmatmul.f32.gmra.mxu0 %v39
    %v67 = vpop.f32.mrf.mxu0
    %v68 = vadd.f32 %v29, %v67
    %69 = vmatmul.f32.gmra.mxu0 %v42
    %v70 = vpop.f32.mrf.mxu0
    %v71 = vadd.f32 %v30, %v70
    %72 = vdwg.mxu0
    %vm73 = vcmask 261120
    %74 = vst.msk [vmem:[#allocation2] sm:$0xff] %vm73, %v62
    %75 = vst.msk [vmem:[#allocation2 + $0x8] sm:$0xff] %vm73, %v65
    %76 = vst.msk [vmem:[#allocation2 + $0x10] sm:$0xff] %vm73, %v68
    %77 = vst.msk [vmem:[#allocation2 + $0x18] sm:$0xff] %vm73, %v71
    // Predicated region
    $region14: #{patch_embed_forward.1} parent=1 // pred_check
      _
    $region15: #{patch_embed_forward.1} parent=1 // pred_check_branch
      %79 = sbr.rel (0) target = $region17
    $region16: #{patch_embed_forward.1} parent=1 // pred_region
      %81 = vsyncadd [#allocation3], 0
      %s82 = sshll.u32 [#allocation2], 4
      %s83 = int_to_ptr.vmem [resolvable:$true] %s82
      %s84 = sshll.u32 %s3, 4
      %s85 = int_to_ptr.hbm [resolvable:$true] %s84
      %90 = dma.vmem_to_hbm [thread:$0]  %s83, 512, %s85, [#allocation3], 128, 128, 8
    $region17: #{patch_embed_forward.1} parent=1 // pred_fallthru
      _
    // Predicated region
    $region18: #{patch_embed_forward.1} parent=1 // pred_check
      _
    $region19: #{patch_embed_forward.1} parent=1 // pred_check_branch
      %92 = sbr.rel (0) target = $region21
    $region20: #{patch_embed_forward.1} parent=1 // pred_region
      %94 = dma.done [#allocation3], 512
    $region21: #{patch_embed_forward.1} parent=1 // pred_fallthru
      _
    %95 = vsyncpa [#allocation3], 1

</llo_original>
